<compile_context>
chip_gen: v7x
topology: tpu7x:2x2x1
jax: 0.10.0
libtpu: 0.0.40
codegen_flags: <defaults>
</compile_context>

<pallas_src>
import math
import functools

import jax
import jax.numpy as jnp
from jax import lax
from jax.experimental import pallas as pl
from jax.experimental.pallas import tpu as pltpu


def _bert_attention_kernel(
    x_ref,        # (1, S, H)   f32  input tile for this batch element
    wqkv_ref,     # (1, H, 3*dh) bf16 fused, pre-transposed [Wq|Wk|Wv] block for head h
    bqkv_ref,     # (1, 1, 3*dh) f32  fused [bq|bk|bv] block for head h
    wo_ref,       # (1, dh, H)  bf16 rows of Wo.T belonging to head h
    bo_ref,       # (1, H)      f32
    gamma_ref,    # (1, H)      f32
    beta_ref,     # (1, H)      f32
    out_ref,      # (1, S, H)
    acc_ref,      # (S, H) f32 scratch — accumulates per-head output-projection partials
    *,
    head_size: int,
    layer_norm_eps: float,
):
    h = pl.program_id(1)
    dh = head_size
    scale = 1.0 / math.sqrt(dh)

    x = x_ref[0]                               # (S, H) f32 (kept for residual)
    xb = x.astype(jnp.bfloat16)                # bf16 for MXU

    # --- fused Q/K/V projection for this head: one (S,H) x (H,3*dh) matmul ---
    qkv = jnp.dot(xb, wqkv_ref[0], preferred_element_type=jnp.float32) + bqkv_ref[0]
    qh = (qkv[:, 0 * dh:1 * dh] * scale).astype(jnp.bfloat16)   # scale folded into q
    kh = qkv[:, 1 * dh:2 * dh].astype(jnp.bfloat16)
    vh = qkv[:, 2 * dh:3 * dh].astype(jnp.bfloat16)

    # --- scaled dot-product attention (no explicit transpose: contract last dims) ---
    scores = lax.dot_general(
        qh, kh, (((1,), (1,)), ((), ())), preferred_element_type=jnp.float32
    )                                           # (S, S) f32
    m = jnp.max(scores, axis=-1, keepdims=True)
    e = jnp.exp(scores - m)
    denom = jnp.sum(e, axis=-1, keepdims=True)
    probs = e * pl.reciprocal(denom, approx=True)               # EUP reciprocal

    ctx = jnp.dot(probs.astype(jnp.bfloat16), vh,
                  preferred_element_type=jnp.float32)           # (S, dh) f32

    # --- per-head slice of the output dense, accumulated across the head axis ---
    partial = jnp.dot(ctx.astype(jnp.bfloat16), wo_ref[0],
                      preferred_element_type=jnp.float32)       # (S, H) f32

    @pl.when(h == 0)
    def _():
        acc_ref[...] = jnp.zeros_like(acc_ref)

    acc_ref[...] += partial

    # --- finalize on the last head: bias + residual + LayerNorm (all f32) ---
    @pl.when(h == pl.num_programs(1) - 1)
    def _():
        y = acc_ref[...] + bo_ref[0] + x
        mean = jnp.mean(y, axis=-1, keepdims=True)
        var = jnp.mean((y - mean) ** 2, axis=-1, keepdims=True)
        normed = (y - mean) * lax.rsqrt(var + layer_norm_eps)
        out_ref[0] = (normed * gamma_ref[0] + beta_ref[0]).astype(out_ref.dtype)


def _prepare_params(params, num_heads):
    """One-time wrapper-side prep: transpose, fuse Q/K/V per head, cast weights to bf16.

    PyTorch nn.Linear convention: W is [out_features, in_features], y = x @ W.T + b.
    """
    H = params["wq"].shape[0]
    assert H % num_heads == 0
    dh = H // num_heads

    def split_out_cols(w):                       # W.T: (H_in, H_out) -> (H, nh, dh)
        return w.T.reshape(H, num_heads, dh)

    wqkv = jnp.stack(
        [split_out_cols(params["wq"]),
         split_out_cols(params["wk"]),
         split_out_cols(params["wv"])], axis=2)            # (H, nh, 3, dh)
    wqkv = wqkv.transpose(1, 0, 2, 3).reshape(num_heads, H, 3 * dh)

    def split_bias(b):                           # (1, H) -> (nh, dh)
        return b.reshape(num_heads, dh)

    bqkv = jnp.stack(
        [split_bias(params["bq"]), split_bias(params["bk"]), split_bias(params["bv"])],
        axis=1).reshape(num_heads, 1, 3 * dh)

    wo_t = params["wo"].T.reshape(num_heads, dh, H)        # rows of Wo.T grouped by head

    return {
        "wqkv": wqkv.astype(jnp.bfloat16),
        "bqkv": bqkv.astype(jnp.float32),
        "wo": wo_t.astype(jnp.bfloat16),
        "bo": params["bo"].astype(jnp.float32),
        "gamma": params["gamma"].astype(jnp.float32),
        "beta": params["beta"].astype(jnp.float32),
    }


def bert_attention(x, prepared, *, num_heads: int, layer_norm_eps: float = 1e-12):
    """x: [B, S, H] float32. prepared: output of _prepare_params."""
    B, S, H = x.shape
    assert H % num_heads == 0
    dh = H // num_heads
    # NOTE: real configs should keep H a multiple of 128 (BERT-base H=768 is) so the
    # output stays lane-dense; the demo shapes below are intentionally tiny.

    kernel = functools.partial(
        _bert_attention_kernel, head_size=dh, layer_norm_eps=layer_norm_eps
    )

    return pl.pallas_call(
        kernel,
        out_shape=jax.ShapeDtypeStruct((B, S, H), x.dtype),
        grid_spec=pltpu.PrefetchScalarGridSpec(
            num_scalar_prefetch=0,
            grid=(B, num_heads),
            in_specs=[
                pl.BlockSpec((1, S, H), lambda b, h: (b, 0, 0)),         # x (constant over h)
                pl.BlockSpec((1, H, 3 * dh), lambda b, h: (h, 0, 0)),    # fused Wqkv.T per head
                pl.BlockSpec((1, 1, 3 * dh), lambda b, h: (h, 0, 0)),    # fused bqkv per head
                pl.BlockSpec((1, dh, H), lambda b, h: (h, 0, 0)),        # Wo.T rows per head
                pl.BlockSpec((1, H), lambda b, h: (0, 0)),               # bo
                pl.BlockSpec((1, H), lambda b, h: (0, 0)),               # gamma
                pl.BlockSpec((1, H), lambda b, h: (0, 0)),               # beta
            ],
            out_specs=pl.BlockSpec((1, S, H), lambda b, h: (b, 0, 0)),
            scratch_shapes=[pltpu.VMEM((S, H), jnp.float32)],
        ),
        compiler_params=pltpu.CompilerParams(
            dimension_semantics=("parallel", "arbitrary"),
        ),
    )(x, prepared["wqkv"], prepared["bqkv"], prepared["wo"],
      prepared["bo"], prepared["gamma"], prepared["beta"])


def _reference(x, params, *, num_heads: int, layer_norm_eps: float = 1e-12):
    """Pure-JAX reference mirroring the PyTorch forward (dropout = identity) with the
    same precision policy as the kernel (bf16 weights/activations, f32 accumulation)."""
    B, S, H = x.shape
    dh = H // num_heads
    bf16, f32 = jnp.bfloat16, jnp.float32

    xb = x.astype(bf16)

    def proj(w, b):
        return jnp.dot(xb, w.T.astype(bf16), preferred_element_type=f32) + b[0]

    q = proj(params["wq"], params["bq"]) * (1.0 / math.sqrt(dh))
    k = proj(params["wk"], params["bk"])
    v = proj(params["wv"], params["bv"])

    def heads(t):
        return t.reshape(B, S, num_heads, dh).transpose(0, 2, 1, 3).astype(bf16)

    qh, kh, vh = heads(q), heads(k), heads(v)
    s = jnp.einsum("bhqd,bhkd->bhqk", qh, kh, preferred_element_type=f32)
    p = jax.nn.softmax(s, axis=-1).astype(bf16)
    ctx = jnp.einsum("bhqk,bhkd->bhqd", p, vh, preferred_element_type=f32)
    ctx = ctx.transpose(0, 2, 1, 3).reshape(B, S, H).astype(bf16)

    out = jnp.dot(ctx, params["wo"].T.astype(bf16),
                  preferred_element_type=f32) + params["bo"][0]
    y = out + x
    mean = jnp.mean(y, axis=-1, keepdims=True)
    var = jnp.mean((y - mean) ** 2, axis=-1, keepdims=True)
    return (y - mean) * lax.rsqrt(var + layer_norm_eps) * params["gamma"][0] + params["beta"][0]


if __name__ == "__main__":
    # Small BERT-ish config: batch=2, seq=8, hidden=32, heads=4 (head_size=8)
    B, S, H = 2, 8, 32
    NUM_HEADS = 4
    EPS = 1e-12

    key = jax.random.PRNGKey(0)
    keys = jax.random.split(key, 10)

    def init_w(k):
        return jax.random.normal(k, (H, H), dtype=jnp.float32) * 0.02

    def init_b(k):
        return jax.random.normal(k, (1, H), dtype=jnp.float32) * 0.02

    params = {
        "wq": init_w(keys[0]), "bq": init_b(keys[1]),
        "wk": init_w(keys[2]), "bk": init_b(keys[3]),
        "wv": init_w(keys[4]), "bv": init_b(keys[5]),
        "wo": init_w(keys[6]), "bo": init_b(keys[7]),
        "gamma": jnp.ones((1, H), dtype=jnp.float32),
        "beta": jnp.zeros((1, H), dtype=jnp.float32),
    }

    x = jax.random.normal(keys[8], (B, S, H), dtype=jnp.float32)

    prepared = _prepare_params(params, NUM_HEADS)
    out = bert_attention(x, prepared, num_heads=NUM_HEADS, layer_norm_eps=EPS)
    out = jax.block_until_ready(out)

    ref = _reference(x, params, num_heads=NUM_HEADS, layer_norm_eps=EPS)
    assert out.shape == (B, S, H)
    # Tolerance absorbs bf16 activations + approximate (EUP) softmax reciprocal;
    # structural bugs would produce O(0.1..1) errors.
    assert jnp.allclose(out, ref, atol=1e-2, rtol=1e-2), "mismatch vs reference"

    print("KERNEL_OK")
</pallas_src>

<mosaic_0001>
module attributes {stable_mosaic.version = 11 : i64} {
  func.func @_bert_attention_kernel(%arg0: i32, %arg1: i32, %arg2: memref<1x8x32xf32, #tpu.memory_space<vmem>>, %arg3: memref<1x32x24xbf16, #tpu.memory_space<vmem>>, %arg4: memref<1x1x24xf32, #tpu.memory_space<vmem>>, %arg5: memref<1x8x32xbf16, #tpu.memory_space<vmem>>, %arg6: memref<1x32xf32, #tpu.memory_space<vmem>>, %arg7: memref<1x32xf32, #tpu.memory_space<vmem>>, %arg8: memref<1x32xf32, #tpu.memory_space<vmem>>, %arg9: memref<1x8x32xf32, #tpu.memory_space<vmem>>, %arg10: memref<8x32xf32, #tpu.memory_space<vmem>>) attributes {dimension_semantics = [#tpu.dimension_semantics<parallel>, #tpu.dimension_semantics<arbitrary>], iteration_bounds = array<i64: 2, 4>, scalar_prefetch = 0 : i64, scratch_operands = 1 : i64, tpu.core_type = #tpu.core_type<tc>, window_params = [{transform_indices = @transform_0, window_bounds = array<i64: 1, 8, 32>}, {transform_indices = @transform_1, window_bounds = array<i64: 1, 32, 24>}, {transform_indices = @transform_2, window_bounds = array<i64: 1, 1, 24>}, {transform_indices = @transform_3, window_bounds = array<i64: 1, 8, 32>}, {pipeline_mode = #tpu.pipeline_mode<synchronous>, transform_indices = @transform_4, window_bounds = array<i64: 1, 32>}, {pipeline_mode = #tpu.pipeline_mode<synchronous>, transform_indices = @transform_5, window_bounds = array<i64: 1, 32>}, {pipeline_mode = #tpu.pipeline_mode<synchronous>, transform_indices = @transform_6, window_bounds = array<i64: 1, 32>}, {transform_indices = @transform_7, window_bounds = array<i64: 1, 8, 32>}]} {
    %c0 = arith.constant 0 : index
    %c0_0 = arith.constant 0 : index
    %c0_1 = arith.constant 0 : index
    %0 = vector.load %arg2[%c0, %c0_0, %c0_1] : memref<1x8x32xf32, #tpu.memory_space<vmem>>, vector<1x8x32xf32>
    %1 = vector.shape_cast %0 : vector<1x8x32xf32> to vector<8x32xf32>
    %2 = arith.truncf %1 : vector<8x32xf32> to vector<8x32xbf16>
    %c0_2 = arith.constant 0 : index
    %c0_3 = arith.constant 0 : index
    %c0_4 = arith.constant 0 : index
    %3 = vector.load %arg3[%c0_2, %c0_3, %c0_4] : memref<1x32x24xbf16, #tpu.memory_space<vmem>>, vector<1x32x24xbf16>
    %4 = vector.shape_cast %3 : vector<1x32x24xbf16> to vector<32x24xbf16>
    %cst = arith.constant dense<0.000000e+00> : vector<8x24xf32>
    %5 = tpu.matmul %2, %4, %cst {dimension_numbers = #tpu.dot_dimension_numbers<[1], [0], [0], [1], [0, 0, 1, 1], [], []>} : vector<8x32xbf16>, vector<32x24xbf16>, vector<8x24xf32> -> vector<8x24xf32>
    %c0_5 = arith.constant 0 : index
    %c0_6 = arith.constant 0 : index
    %c0_7 = arith.constant 0 : index
    %6 = vector.load %arg4[%c0_5, %c0_6, %c0_7] : memref<1x1x24xf32, #tpu.memory_space<vmem>>, vector<1x1x24xf32>
    %7 = vector.shape_cast %6 : vector<1x1x24xf32> to vector<1x24xf32>
    %8 = vector.broadcast %7 : vector<1x24xf32> to vector<8x24xf32>
    %9 = arith.addf %5, %8 : vector<8x24xf32>
    %10 = vector.extract_strided_slice %9 {offsets = [0, 0], sizes = [8, 8], strides = [1, 1]} : vector<8x24xf32> to vector<8x8xf32>
    %cst_8 = arith.constant 0.353553385 : f32
    %11 = vector.broadcast %cst_8 : f32 to vector<8x8xf32>
    %12 = arith.mulf %10, %11 : vector<8x8xf32>
    %13 = arith.truncf %12 : vector<8x8xf32> to vector<8x8xbf16>
    %14 = vector.extract_strided_slice %9 {offsets = [0, 8], sizes = [8, 8], strides = [1, 1]} : vector<8x24xf32> to vector<8x8xf32>
    %15 = arith.truncf %14 : vector<8x8xf32> to vector<8x8xbf16>
    %16 = vector.extract_strided_slice %9 {offsets = [0, 16], sizes = [8, 8], strides = [1, 1]} : vector<8x24xf32> to vector<8x8xf32>
    %17 = arith.truncf %16 : vector<8x8xf32> to vector<8x8xbf16>
    %cst_9 = arith.constant dense<0.000000e+00> : vector<8x8xf32>
    %18 = tpu.matmul %13, %15, %cst_9 {dimension_numbers = #tpu.dot_dimension_numbers<[1], [1], [0], [0], [0, 0, 1, 0], [], []>} : vector<8x8xbf16>, vector<8x8xbf16>, vector<8x8xf32> -> vector<8x8xf32>
    %cst_10 = arith.constant dense<0xFF800000> : vector<8xf32>
    %19 = vector.multi_reduction <maximumf>, %18, %cst_10 [1] : vector<8x8xf32> to vector<8xf32>
    %20 = vector.shape_cast %19 : vector<8xf32> to vector<8x1xf32>
    %21 = vector.broadcast %20 : vector<8x1xf32> to vector<8x8xf32>
    %22 = arith.subf %18, %21 : vector<8x8xf32>
    %23 = math.exp %22 : vector<8x8xf32>
    %cst_11 = arith.constant dense<0.000000e+00> : vector<8xf32>
    %24 = vector.multi_reduction <add>, %23, %cst_11 [1] : vector<8x8xf32> to vector<8xf32>
    %25 = vector.shape_cast %24 : vector<8xf32> to vector<8x1xf32>
    %26 = tpu.reciprocal %25 {approx = true} : vector<8x1xf32> -> vector<8x1xf32>
    %27 = vector.broadcast %26 : vector<8x1xf32> to vector<8x8xf32>
    %28 = arith.mulf %23, %27 : vector<8x8xf32>
    %29 = arith.truncf %28 : vector<8x8xf32> to vector<8x8xbf16>
    %cst_12 = arith.constant dense<0.000000e+00> : vector<8x8xf32>
    %30 = tpu.matmul %29, %17, %cst_12 {dimension_numbers = #tpu.dot_dimension_numbers<[1], [0], [0], [1], [0, 0, 1, 1], [], []>} : vector<8x8xbf16>, vector<8x8xbf16>, vector<8x8xf32> -> vector<8x8xf32>
    %31 = arith.truncf %30 : vector<8x8xf32> to vector<8x8xbf16>
    %c0_13 = arith.constant 0 : index
    %c0_14 = arith.constant 0 : index
    %c0_15 = arith.constant 0 : index
    %32 = vector.load %arg5[%c0_13, %c0_14, %c0_15] : memref<1x8x32xbf16, #tpu.memory_space<vmem>>, vector<1x8x32xbf16>
    %33 = vector.shape_cast %32 : vector<1x8x32xbf16> to vector<8x32xbf16>
    %cst_16 = arith.constant dense<0.000000e+00> : vector<8x32xf32>
    %34 = tpu.matmul %31, %33, %cst_16 {dimension_numbers = #tpu.dot_dimension_numbers<[1], [0], [0], [1], [0, 0, 1, 1], [], []>} : vector<8x8xbf16>, vector<8x32xbf16>, vector<8x32xf32> -> vector<8x32xf32>
    %c0_i32 = arith.constant 0 : i32
    %35 = arith.cmpi eq, %arg1, %c0_i32 : i32
    %36 = arith.extui %35 : i1 to i32
    %c0_i32_17 = arith.constant 0 : i32
    %37 = arith.cmpi ne, %36, %c0_i32_17 : i32
    scf.if %37 {
      %cst_23 = arith.constant 0.000000e+00 : f32
      %44 = vector.broadcast %cst_23 : f32 to vector<8x32xf32>
      %c0_24 = arith.constant 0 : index
      %c0_25 = arith.constant 0 : index
      %45 = vector.load %arg10[%c0_24, %c0_25] : memref<8x32xf32, #tpu.memory_space<vmem>>, vector<8x32xf32>
      tpu.vector_store %arg10[%c0_24, %c0_25], %44 {strides = array<i32>} : memref<8x32xf32, #tpu.memory_space<vmem>>, vector<8x32xf32>,
    } else {
    }
    %c0_18 = arith.constant 0 : index
    %c0_19 = arith.constant 0 : index
    %38 = vector.load %arg10[%c0_18, %c0_19] : memref<8x32xf32, #tpu.memory_space<vmem>>, vector<8x32xf32>
    %39 = arith.addf %38, %34 : vector<8x32xf32>
    %c0_20 = arith.constant 0 : index
    %c0_21 = arith.constant 0 : index
    %40 = vector.load %arg10[%c0_20, %c0_21] : memref<8x32xf32, #tpu.memory_space<vmem>>, vector<8x32xf32>
    tpu.vector_store %arg10[%c0_20, %c0_21], %39 {strides = array<i32>} : memref<8x32xf32, #tpu.memory_space<vmem>>, vector<8x32xf32>,
    %c3_i32 = arith.constant 3 : i32
    %41 = arith.cmpi eq, %arg1, %c3_i32 : i32
    %42 = arith.extui %41 : i1 to i32
    %c0_i32_22 = arith.constant 0 : i32
    %43 = arith.cmpi ne, %42, %c0_i32_22 : i32
    scf.if %43 {
      %c0_23 = arith.constant 0 : index
      %c0_24 = arith.constant 0 : index
      %44 = vector.load %arg10[%c0_23, %c0_24] : memref<8x32xf32, #tpu.memory_space<vmem>>, vector<8x32xf32>
      %c0_25 = arith.constant 0 : index
      %c0_26 = arith.constant 0 : index
      %45 = vector.load %arg6[%c0_25, %c0_26] : memref<1x32xf32, #tpu.memory_space<vmem>>, vector<1x32xf32>
      %46 = vector.shape_cast %45 : vector<1x32xf32> to vector<32xf32>
      %47 = vector.shape_cast %46 : vector<32xf32> to vector<1x32xf32>
      %48 = vector.broadcast %47 : vector<1x32xf32> to vector<8x32xf32>
      %49 = arith.addf %44, %48 : vector<8x32xf32>
      %50 = arith.addf %49, %1 : vector<8x32xf32>
      %cst_27 = arith.constant dense<0.000000e+00> : vector<8xf32>
      %51 = vector.multi_reduction <add>, %50, %cst_27 [1] : vector<8x32xf32> to vector<8xf32>
      %52 = vector.shape_cast %51 : vector<8xf32> to vector<8x1xf32>
      %cst_28 = arith.constant 3.200000e+01 : f32
      %53 = vector.broadcast %cst_28 : f32 to vector<8x1xf32>
      %54 = arith.divf %52, %53 : vector<8x1xf32>
      %55 = vector.broadcast %54 : vector<8x1xf32> to vector<8x32xf32>
      %56 = arith.subf %50, %55 : vector<8x32xf32>
      %57 = arith.mulf %56, %56 : vector<8x32xf32>
      %cst_29 = arith.constant dense<0.000000e+00> : vector<8xf32>
      %58 = vector.multi_reduction <add>, %57, %cst_29 [1] : vector<8x32xf32> to vector<8xf32>
      %59 = vector.shape_cast %58 : vector<8xf32> to vector<8x1xf32>
      %cst_30 = arith.constant 3.200000e+01 : f32
      %60 = vector.broadcast %cst_30 : f32 to vector<8x1xf32>
      %61 = arith.divf %59, %60 : vector<8x1xf32>
      %62 = vector.broadcast %54 : vector<8x1xf32> to vector<8x32xf32>
      %63 = arith.subf %50, %62 : vector<8x32xf32>
      %cst_31 = arith.constant 9.99999996E-13 : f32
      %64 = vector.broadcast %cst_31 : f32 to vector<8x1xf32>
      %65 = arith.addf %61, %64 : vector<8x1xf32>
      %66 = math.rsqrt %65 : vector<8x1xf32>
      %67 = vector.broadcast %66 : vector<8x1xf32> to vector<8x32xf32>
      %68 = arith.mulf %63, %67 : vector<8x32xf32>
      %c0_32 = arith.constant 0 : index
      %c0_33 = arith.constant 0 : index
      %69 = vector.load %arg7[%c0_32, %c0_33] : memref<1x32xf32, #tpu.memory_space<vmem>>, vector<1x32xf32>
      %70 = vector.shape_cast %69 : vector<1x32xf32> to vector<32xf32>
      %71 = vector.shape_cast %70 : vector<32xf32> to vector<1x32xf32>
      %72 = vector.broadcast %71 : vector<1x32xf32> to vector<8x32xf32>
      %73 = arith.mulf %68, %72 : vector<8x32xf32>
      %c0_34 = arith.constant 0 : index
      %c0_35 = arith.constant 0 : index
      %74 = vector.load %arg8[%c0_34, %c0_35] : memref<1x32xf32, #tpu.memory_space<vmem>>, vector<1x32xf32>
      %75 = vector.shape_cast %74 : vector<1x32xf32> to vector<32xf32>
      %76 = vector.shape_cast %75 : vector<32xf32> to vector<1x32xf32>
      %77 = vector.broadcast %76 : vector<1x32xf32> to vector<8x32xf32>
      %78 = arith.addf %73, %77 : vector<8x32xf32>
      %c0_36 = arith.constant 0 : index
      %c0_37 = arith.constant 0 : index
      %c0_38 = arith.constant 0 : index
      %79 = vector.load %arg9[%c0_36, %c0_37, %c0_38] : memref<1x8x32xf32, #tpu.memory_space<vmem>>, vector<1x8x32xf32>
      %80 = vector.shape_cast %79 : vector<1x8x32xf32> to vector<8x32xf32>
      %81 = vector.shape_cast %78 : vector<8x32xf32> to vector<1x8x32xf32>
      tpu.vector_store %arg9[%c0_36, %c0_37, %c0_38], %81 {strides = array<i32>} : memref<1x8x32xf32, #tpu.memory_space<vmem>>, vector<1x8x32xf32>,
    } else {
    }
    return
  }
  func.func @transform_0(%arg0: i32, %arg1: i32) -> (i32, i32, i32) {
    %c0_i32 = arith.constant 0 : i32
    %c0_i32_0 = arith.constant 0 : i32
    %c0_i32_1 = arith.constant 0 : i32
    return %arg0, %c0_i32, %c0_i32_0 : i32, i32, i32
  }
  func.func @transform_1(%arg0: i32, %arg1: i32) -> (i32, i32, i32) {
    %c0_i32 = arith.constant 0 : i32
    %c0_i32_0 = arith.constant 0 : i32
    %c0_i32_1 = arith.constant 0 : i32
    return %arg1, %c0_i32, %c0_i32_0 : i32, i32, i32
  }
  func.func @transform_2(%arg0: i32, %arg1: i32) -> (i32, i32, i32) {
    %c0_i32 = arith.constant 0 : i32
    %c0_i32_0 = arith.constant 0 : i32
    %c0_i32_1 = arith.constant 0 : i32
    return %arg1, %c0_i32, %c0_i32_0 : i32, i32, i32
  }
  func.func @transform_3(%arg0: i32, %arg1: i32) -> (i32, i32, i32) {
    %c0_i32 = arith.constant 0 : i32
    %c0_i32_0 = arith.constant 0 : i32
    %c0_i32_1 = arith.constant 0 : i32
    return %arg1, %c0_i32, %c0_i32_0 : i32, i32, i32
  }
  func.func @transform_4(%arg0: i32, %arg1: i32) -> (i32, i32) {
    %c0_i32 = arith.constant 0 : i32
    %c0_i32_0 = arith.constant 0 : i32
    %c0_i32_1 = arith.constant 0 : i32
    return %c0_i32, %c0_i32_0 : i32, i32
  }
  func.func @transform_5(%arg0: i32, %arg1: i32) -> (i32, i32) {
    %c0_i32 = arith.constant 0 : i32
    %c0_i32_0 = arith.constant 0 : i32
    %c0_i32_1 = arith.constant 0 : i32
    return %c0_i32, %c0_i32_0 : i32, i32
  }
  func.func @transform_6(%arg0: i32, %arg1: i32) -> (i32, i32) {
    %c0_i32 = arith.constant 0 : i32
    %c0_i32_0 = arith.constant 0 : i32
    %c0_i32_1 = arith.constant 0 : i32
    return %c0_i32, %c0_i32_0 : i32, i32
  }
  func.func @transform_7(%arg0: i32, %arg1: i32) -> (i32, i32, i32) {
    %c0_i32 = arith.constant 0 : i32
    %c0_i32_0 = arith.constant 0 : i32
    %c0_i32_1 = arith.constant 0 : i32
    return %arg0, %c0_i32, %c0_i32_0 : i32, i32, i32
  }
}

</mosaic_0001>

<llo_original>
// kernel: tpu_custom_call.1
$region0: #{tpu_custom_call.1}
  #allocation0 [shape = 'u32[]', space=smem, size = 0x4, offset = 0x4, fixed_abs, tag = 'smem constant byte address 0x4 - core index']
  #allocation1 [shape = 'u32[144,128]{1,0:T(1,128)}', space=vmem, size = 0x12000, scoped, tag = 'internal scratch']
  #allocation2 [shape = 'f32[8,32]{1,0:T(8,128)}', space=vmem, size = 0x1000, scoped, tag = 'scratch operand']
  %s0 = inlined_call_operand.vmem [shape: f32[2,8,32], index: 0, kind: input, shape index: {}]
  %s1 = inlined_call_operand.vmem [shape: bf16[4,32,24], index: 1, kind: input, shape index: {}]
  %s2 = inlined_call_operand.vmem [shape: f32[4,1,24], index: 2, kind: input, shape index: {}]
  %s3 = inlined_call_operand.vmem [shape: bf16[4,8,32], index: 3, kind: input, shape index: {}]
  %s4 = inlined_call_operand.vmem [shape: f32[1,32], index: 4, kind: input, shape index: {}]
  %s5 = inlined_call_operand.vmem [shape: f32[1,32], index: 5, kind: input, shape index: {}]
  %s6 = inlined_call_operand.vmem [shape: f32[1,32], index: 6, kind: input, shape index: {}]
  %s7 = inlined_call_operand.hbm [shape: f32[2,8,32], index: 7, kind: output, shape index: {}]
  %s8 = sld [smem:[#allocation0]]
  $region69: #{tpu_custom_call.1} parent=0
    _
  %s10 = ssub.s32 1, %s8
  %s11 = scalar_select 0, %s10, %s8
  $region1: #{tpu_custom_call.1} parent=0
    #allocation3 [shape = 'u8[8192]{0}', space=vmem, size = 0x2000, scoped, tag = 'output window, operand 0']
    #allocation4 [shape = 's32[2]{0}', space=sflag, size = 0x8, scoped, tag = 'scoped memory for tpu_custom_call.1']
    %12 = vsyncpa [#allocation4], 0
    %s13 = scalar_lea.sflag [#allocation4], 1
    %14 = vsyncpa %s13, 0
    loop: start=0, step=1, limit=10
    $region2: #{tpu_custom_call.1} parent=1 // loop_pre_header
      _
    $region3: #{tpu_custom_call.1} parent=1 // loop_header
      %s16 = sphi 0, %s20
      %p17 = scmp.ge.s32.totalorder %s16, 10
      %s23 = sphi 0, %s35
      %s24 = sphi 0, %s31
      %s25 = sphi 0, %s23
      %s26 = sphi 0, %s24
      %s27 = sphi 0, %s25
      %s28 = sphi 0, %s26
      %s38 = sphi 0, %s40
      %s41 = sphi 0, %s38
      %s42 = sphi 0, %s41
      %s58 = sphi 0, %s42
      %s64 = sphi 0, %s66
      %s67 = sphi 0, %s64
      %s68 = sphi 0, %s67
      %s84 = sphi 0, %s68
      %s90 = sphi 0, %s92
      %s93 = sphi 0, %s90
      %s94 = sphi 0, %s93
      %s110 = sphi 0, %s94
      %s116 = sphi 0, %s118
      %s119 = sphi 0, %s116
      %s120 = sphi 0, %s119
      %s136 = sphi 0, %s120
      %s140 = sphi 0, %s140
      %s142 = sphi 0, %s140
      %s143 = sphi 0, %s142
      %s157 = sphi 0, %s143
      %s161 = sphi 0, %s161
      %s163 = sphi 0, %s161
      %s164 = sphi 0, %s163
      %s178 = sphi 0, %s164
      %s182 = sphi 0, %s182
      %s184 = sphi 0, %s182
      %s185 = sphi 0, %s184
      %s199 = sphi 0, %s185
      %s205 = sphi 0, %s207
      %s208 = sphi 0, %s205
      %s209 = sphi 0, %s208
      %s225 = sphi 0, %s209
    $region4: #{tpu_custom_call.1} parent=1 // loop_header_branch
      %19 = sbr.rel (%p17) target = $region8
    $region5: #{tpu_custom_call.1} parent=1 // loop_body
      %s21 = ssub.s32 %s16, 1
      %s22 = ssub.s32 %s16, 2
      %s29 = sadd.s32 1, %s24
      %p30 = scmp.ge.s32.totalorder %s29, 4
      %s31 = scalar_select %p30, 0, %s29
      %s32 = sadd.s32 1, %s23
      %s33 = scalar_select %p30, %s32, %s23
      %p34 = scmp.ge.s32.totalorder %s33, 2
      %s35 = scalar_select %p34, 0, %s33
      %s36 = ssub.s32 %s23, %s35
      %p37 = scmp.eq.s32.totalorder %s36, 0
      %s39 = sadd.s32 %s38, 1
      %s40 = scalar_select %p37, %s38, %s39
      %p43 = pneg %p37
      %p44 = scmp.eq.s32.totalorder %s16, 7
      %p45 = por %p43, %p44
      %p46 = scmp.ne.s32.totalorder %s38, %s41
      %p47 = scmp.eq.s32.totalorder %s16, 0
      %p48 = por %p46, %p47
      %p49 = scmp.ne.s32.totalorder %s38, %s41
      %p50 = scmp.eq.s32.totalorder %s21, 7
      %p51 = por %p49, %p50
      %p52 = scmp.ne.s32.totalorder %s41, %s42
      %p53 = scmp.eq.s32.totalorder %s21, 0
      %p54 = por %p52, %p53
      %p55 = scmp.ne.s32.totalorder %s41, %s42
      %p56 = scmp.eq.s32.totalorder %s22, 7
      %p57 = por %p55, %p56
      %p59 = scmp.ne.s32.totalorder %s42, %s58
      %p60 = scmp.eq.s32.totalorder %s22, 0
      %p61 = por %p59, %p60
      %s62 = ssub.s32 %s24, %s31
      %p63 = scmp.eq.s32.totalorder %s62, 0
      %s65 = sadd.s32 %s64, 1
      %s66 = scalar_select %p63, %s64, %s65
      %p69 = pneg %p63
      %p70 = scmp.eq.s32.totalorder %s16, 7
      %p71 = por %p69, %p70
      %p72 = scmp.ne.s32.totalorder %s64, %s67
      %p73 = scmp.eq.s32.totalorder %s16, 0
      %p74 = por %p72, %p73
      %p75 = scmp.ne.s32.totalorder %s64, %s67
      %p76 = scmp.eq.s32.totalorder %s21, 7
      %p77 = por %p75, %p76
      %p78 = scmp.ne.s32.totalorder %s67, %s68
      %p79 = scmp.eq.s32.totalorder %s21, 0
      %p80 = por %p78, %p79
      %p81 = scmp.ne.s32.totalorder %s67, %s68
      %p82 = scmp.eq.s32.totalorder %s22, 7
      %p83 = por %p81, %p82
      %p85 = scmp.ne.s32.totalorder %s68, %s84
      %p86 = scmp.eq.s32.totalorder %s22, 0
      %p87 = por %p85, %p86
      %s88 = ssub.s32 %s24, %s31
      %p89 = scmp.eq.s32.totalorder %s88, 0
      %s91 = sadd.s32 %s90, 1
      %s92 = scalar_select %p89, %s90, %s91
      %p95 = pneg %p89
      %p96 = scmp.eq.s32.totalorder %s16, 7
      %p97 = por %p95, %p96
      %p98 = scmp.ne.s32.totalorder %s90, %s93
      %p99 = scmp.eq.s32.totalorder %s16, 0
      %p100 = por %p98, %p99
      %p101 = scmp.ne.s32.totalorder %s90, %s93
      %p102 = scmp.eq.s32.totalorder %s21, 7
      %p103 = por %p101, %p102
      %p104 = scmp.ne.s32.totalorder %s93, %s94
      %p105 = scmp.eq.s32.totalorder %s21, 0
      %p106 = por %p104, %p105
      %p107 = scmp.ne.s32.totalorder %s93, %s94
      %p108 = scmp.eq.s32.totalorder %s22, 7
      %p109 = por %p107, %p108
      %p111 = scmp.ne.s32.totalorder %s94, %s110
      %p112 = scmp.eq.s32.totalorder %s22, 0
      %p113 = por %p111, %p112
      %s114 = ssub.s32 %s24, %s31
      %p115 = scmp.eq.s32.totalorder %s114, 0
      %s117 = sadd.s32 %s116, 1
      %s118 = scalar_select %p115, %s116, %s117
      %p121 = pneg %p115
      %p122 = scmp.eq.s32.totalorder %s16, 7
      %p123 = por %p121, %p122
      %p124 = scmp.ne.s32.totalorder %s116, %s119
      %p125 = scmp.eq.s32.totalorder %s16, 0
      %p126 = por %p124, %p125
      %p127 = scmp.ne.s32.totalorder %s116, %s119
      %p128 = scmp.eq.s32.totalorder %s21, 7
      %p129 = por %p127, %p128
      %p130 = scmp.ne.s32.totalorder %s119, %s120
      %p131 = scmp.eq.s32.totalorder %s21, 0
      %p132 = por %p130, %p131
      %p133 = scmp.ne.s32.totalorder %s119, %s120
      %p134 = scmp.eq.s32.totalorder %s22, 7
      %p135 = por %p133, %p134
      %p137 = scmp.ne.s32.totalorder %s120, %s136
      %p138 = scmp.eq.s32.totalorder %s22, 0
      %p139 = por %p137, %p138
      %s141 = sadd.s32 %s140, 1
      %p144 = scmp.eq.s32.totalorder %s16, 7
      %p145 = scmp.ne.s32.totalorder %s140, %s142
      %p146 = scmp.eq.s32.totalorder %s16, 0
      %p147 = por %p145, %p146
      %p148 = scmp.ne.s32.totalorder %s140, %s142
      %p149 = scmp.eq.s32.totalorder %s21, 7
      %p150 = por %p148, %p149
      %p151 = scmp.ne.s32.totalorder %s142, %s143
      %p152 = scmp.eq.s32.totalorder %s21, 0
      %p153 = por %p151, %p152
      %p154 = scmp.ne.s32.totalorder %s142, %s143
      %p155 = scmp.eq.s32.totalorder %s22, 7
      %p156 = por %p154, %p155
      %p158 = scmp.ne.s32.totalorder %s143, %s157
      %p159 = scmp.eq.s32.totalorder %s22, 0
      %p160 = por %p158, %p159
      %s162 = sadd.s32 %s161, 1
      %p165 = scmp.eq.s32.totalorder %s16, 7
      %p166 = scmp.ne.s32.totalorder %s161, %s163
      %p167 = scmp.eq.s32.totalorder %s16, 0
      %p168 = por %p166, %p167
      %p169 = scmp.ne.s32.totalorder %s161, %s163
      %p170 = scmp.eq.s32.totalorder %s21, 7
      %p171 = por %p169, %p170
      %p172 = scmp.ne.s32.totalorder %s163, %s164
      %p173 = scmp.eq.s32.totalorder %s21, 0
      %p174 = por %p172, %p173
      %p175 = scmp.ne.s32.totalorder %s163, %s164
      %p176 = scmp.eq.s32.totalorder %s22, 7
      %p177 = por %p175, %p176
      %p179 = scmp.ne.s32.totalorder %s164, %s178
      %p180 = scmp.eq.s32.totalorder %s22, 0
      %p181 = por %p179, %p180
      %s183 = sadd.s32 %s182, 1
      %p186 = scmp.eq.s32.totalorder %s16, 7
      %p187 = scmp.ne.s32.totalorder %s182, %s184
      %p188 = scmp.eq.s32.totalorder %s16, 0
      %p189 = por %p187, %p188
      %p190 = scmp.ne.s32.totalorder %s182, %s184
      %p191 = scmp.eq.s32.totalorder %s21, 7
      %p192 = por %p190, %p191
      %p193 = scmp.ne.s32.totalorder %s184, %s185
      %p194 = scmp.eq.s32.totalorder %s21, 0
      %p195 = por %p193, %p194
      %p196 = scmp.ne.s32.totalorder %s184, %s185
      %p197 = scmp.eq.s32.totalorder %s22, 7
      %p198 = por %p196, %p197
      %p200 = scmp.ne.s32.totalorder %s185, %s199
      %p201 = scmp.eq.s32.totalorder %s22, 0
      %p202 = por %p200, %p201
      %s203 = ssub.s32 %s23, %s35
      %p204 = scmp.eq.s32.totalorder %s203, 0
      %s206 = sadd.s32 %s205, 1
      %s207 = scalar_select %p204, %s205, %s206
      %p210 = pneg %p204
      %p211 = scmp.eq.s32.totalorder %s16, 7
      %p212 = por %p210, %p211
      %p213 = scmp.ne.s32.totalorder %s205, %s208
      %p214 = scmp.eq.s32.totalorder %s16, 0
      %p215 = por %p213, %p214
      %p216 = scmp.ne.s32.totalorder %s205, %s208
      %p217 = scmp.eq.s32.totalorder %s21, 7
      %p218 = por %p216, %p217
      %p219 = scmp.ne.s32.totalorder %s208, %s209
      %p220 = scmp.eq.s32.totalorder %s21, 0
      %p221 = por %p219, %p220
      %p222 = scmp.ne.s32.totalorder %s208, %s209
      %p223 = scmp.eq.s32.totalorder %s22, 7
      %p224 = por %p222, %p223
      %p226 = scmp.ne.s32.totalorder %s209, %s225
      %p227 = scmp.eq.s32.totalorder %s22, 0
      %p228 = por %p226, %p227
      %p229 = scmp.le.s32.totalorder 1, %s16
      %p230 = scmp.lt.s32.totalorder %s16, 9
      %p231 = pnand %p229, %p230
      %p232 = pneg %p231
      // Predicated region
      $region9: #{tpu_custom_call.1} parent=5 // pred_check
        _
      $region10: #{tpu_custom_call.1} parent=5 // pred_check_branch
        %234 = sbr.rel (%p231) target = $region12
      $region11: #{tpu_custom_call.1} parent=5 // pred_region
        %s235 = ssub.s32 %s16, 1
        // Predicated region
        $region13: #{tpu_custom_call.1} parent=11 // pred_check
          %p236 = pneg %p153
        $region14: #{tpu_custom_call.1} parent=11 // pred_check_branch
          %238 = sbr.rel (%p236) target = $region16
        $region15: #{tpu_custom_call.1} parent=11 // pred_region
          _
        $region16: #{tpu_custom_call.1} parent=11 // pred_fallthru
          _
        // Predicated region
        $region17: #{tpu_custom_call.1} parent=11 // pred_check
          %p239 = pneg %p174
        $region18: #{tpu_custom_call.1} parent=11 // pred_check_branch
          %241 = sbr.rel (%p239) target = $region20
        $region19: #{tpu_custom_call.1} parent=11 // pred_region
          _
        $region20: #{tpu_custom_call.1} parent=11 // pred_fallthru
          _
        // Predicated region
        $region21: #{tpu_custom_call.1} parent=11 // pred_check
          %p242 = pneg %p195
        $region22: #{tpu_custom_call.1} parent=11 // pred_check_branch
          %244 = sbr.rel (%p242) target = $region24
        $region23: #{tpu_custom_call.1} parent=11 // pred_region
          _
        $region24: #{tpu_custom_call.1} parent=11 // pred_fallthru
          _
      $region12: #{tpu_custom_call.1} parent=5 // pred_fallthru
        _
      %p245 = scmp.lt.s32.totalorder %s16, 8
      // Predicated region
      $region25: #{tpu_custom_call.1} parent=5 // pred_check
        %p246 = pneg %p245
      $region26: #{tpu_custom_call.1} parent=5 // pred_check_branch
        %248 = sbr.rel (%p246) target = $region28
      $region27: #{tpu_custom_call.1} parent=5 // pred_region
        // Predicated region
        $region29: #{tpu_custom_call.1} parent=27 // pred_check
          %p249 = pneg %p48
        $region30: #{tpu_custom_call.1} parent=27 // pred_check_branch
          %251 = sbr.rel (%p249) target = $region32
        $region31: #{tpu_custom_call.1} parent=27 // pred_region
          %p252 = scmp.lt.s32.totalorder %s23, 1
          %s253 = scalar_select %p252, %s23, 1
          %s254 = smul.addr %s253, 8
          %s255 = scalar_lea.vmem %s0, %s254
        $region32: #{tpu_custom_call.1} parent=27 // pred_fallthru
          _
        // Predicated region
        $region33: #{tpu_custom_call.1} parent=27 // pred_check
          %p256 = pneg %p74
        $region34: #{tpu_custom_call.1} parent=27 // pred_check_branch
          %258 = sbr.rel (%p256) target = $region36
        $region35: #{tpu_custom_call.1} parent=27 // pred_region
          %p259 = scmp.lt.s32.totalorder %s24, 3
          %s260 = scalar_select %p259, %s24, 3
          %s261 = smul.addr %s260, 4
          %s262 = smul.addr %s261, 4
          %s263 = scalar_lea.vmem %s1, %s262
        $region36: #{tpu_custom_call.1} parent=27 // pred_fallthru
          _
        // Predicated region
        $region37: #{tpu_custom_call.1} parent=27 // pred_check
          %p264 = pneg %p100
        $region38: #{tpu_custom_call.1} parent=27 // pred_check_branch
          %266 = sbr.rel (%p264) target = $region40
        $region39: #{tpu_custom_call.1} parent=27 // pred_region
          %p267 = scmp.lt.s32.totalorder %s24, 3
          %s268 = scalar_select %p267, %s24, 3
          %s269 = scalar_lea.vmem %s2, %s268
        $region40: #{tpu_custom_call.1} parent=27 // pred_fallthru
          _
        // Predicated region
        $region41: #{tpu_custom_call.1} parent=27 // pred_check
          %p270 = pneg %p126
        $region42: #{tpu_custom_call.1} parent=27 // pred_check_branch
          %272 = sbr.rel (%p270) target = $region44
        $region43: #{tpu_custom_call.1} parent=27 // pred_region
          %p273 = scmp.lt.s32.totalorder %s24, 3
          %s274 = scalar_select %p273, %s24, 3
          %s275 = smul.addr %s274, 4
          %s276 = scalar_lea.vmem %s3, %s275
        $region44: #{tpu_custom_call.1} parent=27 // pred_fallthru
          _
      $region28: #{tpu_custom_call.1} parent=5 // pred_fallthru
        _
      %p277 = scmp.le.s32.totalorder 1, %s16
      %p278 = scmp.lt.s32.totalorder %s16, 9
      %p279 = pnand %p277, %p278
      %p280 = pneg %p279
      // Predicated region
      $region45: #{tpu_custom_call.1} parent=5 // pred_check
        _
      $region46: #{tpu_custom_call.1} parent=5 // pred_check_branch
        %282 = sbr.rel (%p279) target = $region48
      $region47: #{tpu_custom_call.1} parent=5 // pred_region
        %s283 = ssub.s32 %s16, 1
        %p284 = scmp.lt.s32.totalorder %s25, 1
        %s285 = scalar_select %p284, %s25, 1
        %s286 = smul.addr %s285, 8
        %s287 = scalar_lea.vmem %s0, %s286
        %p288 = pneg %p54
        %p289 = pneg %p51
        %p290 = scmp.lt.s32.totalorder %s26, 3
        %s291 = scalar_select %p290, %s26, 3
        %s292 = smul.addr %s291, 4
        %s293 = smul.addr %s292, 4
        %s294 = scalar_lea.vmem %s1, %s293
        %p295 = pneg %p80
        %p296 = pneg %p77
        %p297 = scmp.lt.s32.totalorder %s26, 3
        %s298 = scalar_select %p297, %s26, 3
        %s299 = scalar_lea.vmem %s2, %s298
        %p300 = pneg %p106
        %p301 = pneg %p103
        %p302 = scmp.lt.s32.totalorder %s26, 3
        %s303 = scalar_select %p302, %s26, 3
        %s304 = smul.addr %s303, 4
        %s305 = scalar_lea.vmem %s3, %s304
        %p306 = pneg %p132
        %p307 = pneg %p129
        %p308 = pneg %p153
        %p309 = pneg %p150
        %p310 = pneg %p174
        %p311 = pneg %p171
        %p312 = pneg %p195
        %p313 = pneg %p192
        %p314 = pneg %p221
        %p315 = pneg %p218
        %s316 = sand.u32 %s208, 1
        %s317 = scalar_lea.sflag [#allocation4], %s316
        %s318 = sand.u32 %s208, 1
        %s319 = smul.addr %s318, 8
        %s320 = scalar_lea.vmem [#allocation3], %s319
        %p321 = scmp.lt.s32.totalorder %s25, 1
        %s322 = scalar_select %p321, %s25, 1
        %s323 = smul.addr %s322, 8
        %s324 = scalar_lea.vmem %s0, %s323
        %p325 = scmp.lt.s32.totalorder %s26, 3
        %s326 = scalar_select %p325, %s26, 3
        %s327 = smul.addr %s326, 4
        %s328 = smul.addr %s327, 4
        %s329 = scalar_lea.vmem %s1, %s328
        %p330 = scmp.lt.s32.totalorder %s26, 3
        %s331 = scalar_select %p330, %s26, 3
        %s332 = scalar_lea.vmem %s2, %s331
        %p333 = scmp.lt.s32.totalorder %s26, 3
        %s334 = scalar_select %p333, %s26, 3
        %s335 = smul.addr %s334, 4
        %s336 = scalar_lea.vmem %s3, %s335
        %v338 = vld [vmem:[%s324] sm:$0xff]
        %v339 = vpack.c.bf16 %v338, %v338
        %v340 = vld [vmem:[%s329] sm:$0xf]
        %v341 = vld [vmem:[%s329 + $0x4] sm:$0xf]
        %v342 = vld [vmem:[%s329 + $0x8] sm:$0xf]
        %v343 = vld [vmem:[%s329 + $0xc] sm:$0xf]
        %v344 = vld [vmem:[%s332] sm:$0x1]
        %v346 = vlaneseq
        %v347 = vshrl.u32 %v346, 7
        %v348 = vsub.s32 0, %v347
        %v349 = vrot.slane %v344, %v348
        %v355 = vunpack.c.l.b16 %v340
        %v356 = vunpack.c.l.b16 %v341
        %v357 = vunpack.c.l.b16 %v342
        %v358 = vunpack.c.l.b16 %v343
        %v359 = vpack.c.b16 %v356, %v355
        %v360 = vpack.c.b16 %v358, %v357
        %vm363 = vcmask 261120
        %v365 = vsel %vm363, %v339, 0
        %367 = vmatprep.subr.bf16.mxu0 0
        %368 = vmatpush1.bf16.msra.mxu0 %v359
        %369 = vmatprep.subr.bf16.mxu0 0
        %370 = vmatpush1.bf16.msra.mxu0 %v360
        %371 = vmatprep.subr.bf16.mxu0 0
        %372 = vmatpush1.bf16.msra.mxu0 0
        %373 = vmatprep.subr.bf16.mxu0 0
        %374 = vmatpush1.bf16.msra.mxu0 0
        %375 = vmatprep.subr.bf16.mxu0 0
        %376 = vmatpush1.bf16.msra.mxu0 0
        %377 = vmatprep.subr.bf16.mxu0 0
        %378 = vmatpush1.bf16.msra.mxu0 0
        %379 = vmatprep.subr.bf16.mxu0 0
        %380 = vmatpush1.bf16.msra.mxu0 0
        %381 = vmatprep.subr.bf16.mxu0 0
        %382 = vmatpush1.bf16.msra.mxu0 0
        %383 = vmatprep.subr.bf16.mxu0 0
        %384 = vmatpush1.bf16.msra.mxu0 0
        %385 = vmatprep.subr.bf16.mxu0 0
        %386 = vmatpush1.bf16.msra.mxu0 0
        %387 = vmatprep.subr.bf16.mxu0 0
        %388 = vmatpush1.bf16.msra.mxu0 0
        %389 = vmatprep.subr.bf16.mxu0 0
        %390 = vmatpush1.bf16.msra.mxu0 0
        %391 = vmatprep.subr.bf16.mxu0 0
        %392 = vmatpush1.bf16.msra.mxu0 0
        %393 = vmatprep.subr.bf16.mxu0 0
        %394 = vmatpush1.bf16.msra.mxu0 0
        %395 = vmatprep.subr.bf16.mxu0 0
        %396 = vmatpush1.bf16.msra.mxu0 0
        %397 = vmatprep.subr.bf16.mxu0 0
        %398 = vmatpush1.bf16.msra.mxu0 0
        %399 = vmatprep.mubr.bf16.mxu0 0
        %400 = vmatmul.mubr.bf16.gmra.mrb[0].mxu0 %v365
        %v401 = vpop.f32.mrb[0].mxu0
        %v402 = vadd.f32 %v349, %v401
        %v403 = vpop.f32.mrb[0].mxu0
        %v404 = vpop.f32.mrb[0].mxu0
        %v405 = vpop.f32.mrb[0].mxu0
        %406 = vdwg.mxu0
        %v407 = vmul.f32 %v402, 0.35355338
        %v408 = vpack.c.bf16 %v407, %v407
        %v409 = vpack.c.bf16 %v402, %v402
        %411 = vrot.lane.b32.xlu0 %v409, 120
        %v412 = vpop.permute.xlu0 %411
        %vm413 = vcmask 64512
        %v415 = vsel %vm413, %v408, 0
        %v418 = vsel %vm413, %v412, 0
        %420 = vmatprep.subr.bf16.mxu0 0
        %421 = vmatpush1.bf16.xpose.msra.mxu0 %v418
        %422 = vmatprep.subr.bf16.mxu0 0
        %423 = vmatpush1.bf16.xpose.msra.mxu0 0
        %424 = vmatprep.subr.bf16.mxu0 0
        %425 = vmatpush1.bf16.xpose.msra.mxu0 0
        %426 = vmatprep.subr.bf16.mxu0 0
        %427 = vmatpush1.bf16.xpose.msra.mxu0 0
        %428 = vmatprep.subr.bf16.mxu0 0
        %429 = vmatpush1.bf16.xpose.msra.mxu0 0
        %430 = vmatprep.subr.bf16.mxu0 0
        %431 = vmatpush1.bf16.xpose.msra.mxu0 0
        %432 = vmatprep.subr.bf16.mxu0 0
        %433 = vmatpush1.bf16.xpose.msra.mxu0 0
        %434 = vmatprep.subr.bf16.mxu0 0
        %435 = vmatpush1.bf16.xpose.msra.mxu0 0
        %436 = vmatprep.subr.bf16.mxu0 0
        %437 = vmatpush1.bf16.xpose.msra.mxu0 0
        %438 = vmatprep.subr.bf16.mxu0 0
        %439 = vmatpush1.bf16.xpose.msra.mxu0 0
        %440 = vmatprep.subr.bf16.mxu0 0
        %441 = vmatpush1.bf16.xpose.msra.mxu0 0
        %442 = vmatprep.subr.bf16.mxu0 0
        %443 = vmatpush1.bf16.xpose.msra.mxu0 0
        %444 = vmatprep.subr.bf16.mxu0 0
        %445 = vmatpush1.bf16.xpose.msra.mxu0 0
        %446 = vmatprep.subr.bf16.mxu0 0
        %447 = vmatpush1.bf16.xpose.msra.mxu0 0
        %448 = vmatprep.subr.bf16.mxu0 0
        %449 = vmatpush1.bf16.xpose.msra.mxu0 0
        %450 = vmatprep.subr.bf16.mxu0 0
        %451 = vmatpush1.bf16.xpose.msra.mxu0 0
        %452 = vmatprep.mubr.bf16.mxu0 0
        %453 = vmatmul.mubr.bf16.gmra.mrb[0].mxu0 %v415
        %v454 = vpop.f32.mrb[0].mxu0
        %v455 = vadd.f32 0.0, %v454
        %v456 = vpop.f32.mrb[0].mxu0
        %v457 = vpop.f32.mrb[0].mxu0
        %v458 = vpop.f32.mrb[0].mxu0
        %459 = vdwg.mxu0
        %v460 = vsel %vm413, %v455, -inf
        %461 = vmax.xlane.f32.xlu0 %v460
        %v462 = vpop.xlane.xlu0 %461
        %v463 = vsub.f32 %v455, %v462
        %v464 = vmul.f32 %v463, 1.442695
        %v465 = vpow.pop %v464
        %v466 = vsel %vm413, %v465, 0.0
        %467 = vadd.xlane.f32.xlu0 %v466
        %v468 = vpop.xlane.xlu0 %467
        %v469 = vrcp.pop %v468
        %v470 = vmul.f32 %v465, %v469
        %v471 = vpack.c.bf16 %v470, %v470
        %472 = vrot.lane.b32.xlu0 %v409, 112
        %v473 = vpop.permute.xlu0 %472
        %v475 = vsel %vm413, %v471, 0
        %vm477 = vcmask 1043456
        %v479 = vsel %vm477, %v473, 0
        %481 = vmatprep.subr.bf16.mxu0 0
        %482 = vmatpush1.bf16.msra.mxu0 %v479
        %483 = vmatprep.subr.bf16.mxu0 0
        %484 = vmatpush1.bf16.msra.mxu0 0
        %485 = vmatprep.subr.bf16.mxu0 0
        %486 = vmatpush1.bf16.msra.mxu0 0
        %487 = vmatprep.subr.bf16.mxu0 0
        %488 = vmatpush1.bf16.msra.mxu0 0
        %489 = vmatprep.subr.bf16.mxu0 0
        %490 = vmatpush1.bf16.msra.mxu0 0
        %491 = vmatprep.subr.bf16.mxu0 0
        %492 = vmatpush1.bf16.msra.mxu0 0
        %493 = vmatprep.subr.bf16.mxu0 0
        %494 = vmatpush1.bf16.msra.mxu0 0
        %495 = vmatprep.subr.bf16.mxu0 0
        %496 = vmatpush1.bf16.msra.mxu0 0
        %497 = vmatprep.subr.bf16.mxu0 0
        %498 = vmatpush1.bf16.msra.mxu0 0
        %499 = vmatprep.subr.bf16.mxu0 0
        %500 = vmatpush1.bf16.msra.mxu0 0
        %501 = vmatprep.subr.bf16.mxu0 0
        %502 = vmatpush1.bf16.msra.mxu0 0
        %503 = vmatprep.subr.bf16.mxu0 0
        %504 = vmatpush1.bf16.msra.mxu0 0
        %505 = vmatprep.subr.bf16.mxu0 0
        %506 = vmatpush1.bf16.msra.mxu0 0
        %507 = vmatprep.subr.bf16.mxu0 0
        %508 = vmatpush1.bf16.msra.mxu0 0
        %509 = vmatprep.subr.bf16.mxu0 0
        %510 = vmatpush1.bf16.msra.mxu0 0
        %511 = vmatprep.subr.bf16.mxu0 0
        %512 = vmatpush1.bf16.msra.mxu0 0
        %513 = vmatprep.mubr.bf16.mxu0 0
        %514 = vmatmul.mubr.bf16.gmra.mrb[0].mxu0 %v475
        %v515 = vpop.f32.mrb[0].mxu0
        %v516 = vadd.f32 0.0, %v515
        %v517 = vpop.f32.mrb[0].mxu0
        %v518 = vpop.f32.mrb[0].mxu0
        %v519 = vpop.f32.mrb[0].mxu0
        %520 = vdwg.mxu0
        %v521 = vpack.c.bf16 %v516, %v516
        %v522 = vld [vmem:[%s336] sm:$0xf]
        %v524 = vsel %vm413, %v521, 0
        %v527 = vsel %vm477, %v522, 0
        %529 = vmatprep.subr.bf16.mxu0 0
        %530 = vmatpush1.bf16.msra.mxu0 %v527
        %531 = vmatprep.subr.bf16.mxu0 0
        %532 = vmatpush1.bf16.msra.mxu0 0
        %533 = vmatprep.subr.bf16.mxu0 0
        %534 = vmatpush1.bf16.msra.mxu0 0
        %535 = vmatprep.subr.bf16.mxu0 0
        %536 = vmatpush1.bf16.msra.mxu0 0
        %537 = vmatprep.subr.bf16.mxu0 0
        %538 = vmatpush1.bf16.msra.mxu0 0
        %539 = vmatprep.subr.bf16.mxu0 0
        %540 = vmatpush1.bf16.msra.mxu0 0
        %541 = vmatprep.subr.bf16.mxu0 0
        %542 = vmatpush1.bf16.msra.mxu0 0
        %543 = vmatprep.subr.bf16.mxu0 0
        %544 = vmatpush1.bf16.msra.mxu0 0
        %545 = vmatprep.subr.bf16.mxu0 0
        %546 = vmatpush1.bf16.msra.mxu0 0
        %547 = vmatprep.subr.bf16.mxu0 0
        %548 = vmatpush1.bf16.msra.mxu0 0
        %549 = vmatprep.subr.bf16.mxu0 0
        %550 = vmatpush1.bf16.msra.mxu0 0
        %551 = vmatprep.subr.bf16.mxu0 0
        %552 = vmatpush1.bf16.msra.mxu0 0
        %553 = vmatprep.subr.bf16.mxu0 0
        %554 = vmatpush1.bf16.msra.mxu0 0
        %555 = vmatprep.subr.bf16.mxu0 0
        %556 = vmatpush1.bf16.msra.mxu0 0
        %557 = vmatprep.subr.bf16.mxu0 0
        %558 = vmatpush1.bf16.msra.mxu0 0
        %559 = vmatprep.subr.bf16.mxu0 0
        %560 = vmatpush1.bf16.msra.mxu0 0
        %561 = vmatprep.mubr.bf16.mxu0 0
        %562 = vmatmul.mubr.bf16.gmra.mrb[0].mxu0 %v524
        %v563 = vpop.f32.mrb[0].mxu0
        %v564 = vadd.f32 0.0, %v563
        %v565 = vpop.f32.mrb[0].mxu0
        %v566 = vpop.f32.mrb[0].mxu0
        %v567 = vpop.f32.mrb[0].mxu0
        %568 = vdwg.mxu0
        %p569 = scmp.eq.s32.totalorder %s26, 0
        // Predicated region
        $region49: #{tpu_custom_call.1} parent=47 // pred_check
          %p570 = pneg %p569
        $region50: #{tpu_custom_call.1} parent=47 // pred_check_branch
          %572 = sbr.rel (%p570) target = $region52
        $region51: #{tpu_custom_call.1} parent=47 // pred_region
          %573 = vst.msk [vmem:[#allocation2] sm:$0xff] %vm363, 0.0
        $region52: #{tpu_custom_call.1} parent=47 // pred_fallthru
          _
        %v574 = vld [vmem:[#allocation2] sm:$0xff]
        %v575 = vadd.f32 %v574, %v564
        %576 = vst.msk [vmem:[#allocation2] sm:$0xff] %vm363, %v575
        %p577 = scmp.eq.s32.totalorder %s26, 3
        // Predicated region
        $region53: #{tpu_custom_call.1} parent=47 // pred_check
          %p578 = pneg %p577
        $region54: #{tpu_custom_call.1} parent=47 // pred_check_branch
          %580 = sbr.rel (%p578) target = $region56
        $region55: #{tpu_custom_call.1} parent=47 // pred_region
          %v581 = vld [vmem:[#allocation2] sm:$0xff]
          %v582 = vld [vmem:[%s4] sm:$0x1]
          %v584 = vlaneseq
          %v585 = vshrl.u32 %v584, 7
          %v586 = vsub.s32 0, %v585
          %v587 = vrot.slane %v582, %v586
          %v589 = vadd.f32 %v581, %v587
          %v590 = vadd.f32 %v589, %v338
          %v591 = vsel %vm363, %v590, 0.0
          %592 = vadd.xlane.f32.xlu0 %v591
          %v593 = vpop.xlane.xlu0 %592
          %v594 = vrcp.pop 32.0
          %v595 = vmul.f32 %v593, %v594
          %v596 = vsub.f32 %v590, %v595
          %v597 = vmul.f32 %v596, %v596
          %v598 = vsel %vm363, %v597, 0.0
          %599 = vadd.xlane.f32.xlu0 %v598
          %v600 = vpop.xlane.xlu0 %599
          %v601 = vmul.f32 %v600, %v594
          %v602 = vadd.f32 %v601, 1e-12
          %v603 = vrsqrt.pop %v602
          %v604 = vmul.f32 %v596, %v603
          %v605 = vld [vmem:[%s5] sm:$0x1]
          %v607 = vlaneseq
          %v608 = vshrl.u32 %v607, 7
          %v609 = vsub.s32 0, %v608
          %v610 = vrot.slane %v605, %v609
          %v612 = vmul.f32 %v604, %v610
          %v613 = vld [vmem:[%s6] sm:$0x1]
          %v615 = vlaneseq
          %v616 = vshrl.u32 %v615, 7
          %v617 = vsub.s32 0, %v616
          %v618 = vrot.slane %v613, %v617
          %v620 = vadd.f32 %v612, %v618
          %621 = vst.msk [vmem:[%s320] sm:$0xff] %vm363, %v620
        $region56: #{tpu_custom_call.1} parent=47 // pred_fallthru
          _
        %s622 = sand.u32 %s208, 1
        %s623 = scalar_lea.sflag [#allocation4], %s622
        %s624 = sand.u32 %s208, 1
        %s625 = smul.addr %s624, 8
        %s626 = scalar_lea.vmem [#allocation3], %s625
        // Predicated region
        $region57: #{tpu_custom_call.1} parent=47 // pred_check
          %p627 = pneg %p218
        $region58: #{tpu_custom_call.1} parent=47 // pred_check_branch
          %629 = sbr.rel (%p627) target = $region60
        $region59: #{tpu_custom_call.1} parent=47 // pred_region
          %s631 = ssub.s32 128, 128
          %632 = vsyncadd %s623, %s631
          %s633 = smul.addr %s25, 128
          %s634 = scalar_lea.hbm %s7, %s633
          %s636 = sshll.u32 %s626, 4
          %s637 = int_to_ptr.vmem [resolvable:$true] %s636
          %639 = dma.vmem_to_hbm [thread:$0]  %s637, 128, %s634, %s623
        $region60: #{tpu_custom_call.1} parent=47 // pred_fallthru
          _
      $region48: #{tpu_custom_call.1} parent=5 // pred_fallthru
        _
      %p640 = scmp.le.s32.totalorder 2, %s16
      // Predicated region
      $region61: #{tpu_custom_call.1} parent=5 // pred_check
        %p641 = pneg %p640
      $region62: #{tpu_custom_call.1} parent=5 // pred_check_branch
        %643 = sbr.rel (%p641) target = $region64
      $region63: #{tpu_custom_call.1} parent=5 // pred_region
        %s644 = ssub.s32 %s16, 2
        // Predicated region
        $region65: #{tpu_custom_call.1} parent=63 // pred_check
          %p645 = pneg %p224
        $region66: #{tpu_custom_call.1} parent=63 // pred_check_branch
          %647 = sbr.rel (%p645) target = $region68
        $region67: #{tpu_custom_call.1} parent=63 // pred_region
          %s648 = sand.u32 %s209, 1
          %s649 = scalar_lea.sflag [#allocation4], %s648
          %s650 = sand.u32 %s209, 1
          %s651 = smul.addr %s650, 8
          %s652 = scalar_lea.vmem [#allocation3], %s651
          %653 = dma.done %s649, 128
        $region68: #{tpu_custom_call.1} parent=63 // pred_fallthru
          _
      $region64: #{tpu_custom_call.1} parent=5 // pred_fallthru
        _
    $region6: #{tpu_custom_call.1} parent=1 // loop_footer
      %s20 = sadd.s32 1, %s16
    $region7: #{tpu_custom_call.1} parent=1 // loop_footer_branch
      %15 = sbr.rel target = $region3
    $region8: #{tpu_custom_call.1} parent=1 // loop_exit
      _
    %654 = vsyncpa [#allocation4], 1
    %s655 = scalar_lea.sflag [#allocation4], 1
    %656 = vsyncpa %s655, 1

</llo_original>
